<compile_context>
chip_gen: v7x
topology: tpu7x:2x2x1
jax: 0.10.0
libtpu: 0.0.40
codegen_flags: <defaults>
</compile_context>

<pallas_src>
import functools

import numpy as np
import jax
import jax.numpy as jnp
from jax.experimental import pallas as pl
from jax.experimental.pallas import tpu as pltpu

LOG_STD_MAX = 2.0
LOG_STD_MIN = -20.0


def _round_up(x, m):
    return ((x + m - 1) // m) * m


def _actor_kernel(obs_ref, w1_ref, b1_ref, w2_ref, b2_ref, wh_ref, bh_ref,
                  eps_ref, act_ref, logp_ref, *, act_limit, act_dim, a_pad):
    x = obs_ref[...]

    # MLP trunk: Linear -> ReLU -> Linear -> ReLU (output_activation == activation).
    h = jnp.dot(x, w1_ref[...], preferred_element_type=jnp.float32) + b1_ref[...]
    h = jnp.maximum(h, 0.0)
    h = jnp.dot(h, w2_ref[...], preferred_element_type=jnp.float32) + b2_ref[...]
    h = jnp.maximum(h, 0.0)

    # Fused heads: one (hidden, 2*A_P) matmul; slices are 128-lane aligned.
    head = jnp.dot(h, wh_ref[...], preferred_element_type=jnp.float32) + bh_ref[...]
    mu = head[:, :a_pad]
    log_std = jnp.clip(head[:, a_pad:], LOG_STD_MIN, LOG_STD_MAX)
    std = jnp.exp(log_std)                       # EUP

    # rsample(): mu + std * eps   (eps ~ N(0,1) supplied from outside).
    eps = eps_ref[...]
    pi = mu + std * eps

    # Normal(mu, std).log_prob(pi) - tanh correction, per lane, with
    # (pi - mu)/std == eps exactly and both scalar constants folded into C:
    #   term = -0.5*eps^2 - log_std - 0.5*log(2*pi)
    #          - 2*(log(2) - pi - softplus(-2*pi))
    C = -(0.5 * float(np.log(2.0 * np.pi)) + 2.0 * float(np.log(2.0)))
    term = (-0.5 * (eps * eps) - log_std
            + 2.0 * (pi + jnp.logaddexp(0.0, -2.0 * pi))   # softplus on EUP
            + C)

    # Mask out padded action lanes before the lane reduction (XLU).
    col = jax.lax.broadcasted_iota(jnp.int32, pi.shape, 1)
    valid = col < act_dim
    logp_pi = jnp.sum(jnp.where(valid, term, 0.0), axis=-1, keepdims=True)

    # Full-lane stores (padded lanes of pi are exactly 0 -> tanh(0)*limit = 0).
    act_ref[...] = act_limit * jnp.tanh(pi)
    logp_ref[...] = jnp.broadcast_to(logp_pi, logp_ref.shape)


def init_params(key, obs_dim, hidden_sizes, act_dim):
    """Deterministic synthetic weights (stored as (in, out), like W^T of nn.Linear)."""
    sizes = [obs_dim] + list(hidden_sizes)
    keys = jax.random.split(key, 8)
    params = {}
    params["w1"] = 0.2 * jax.random.normal(keys[0], (sizes[0], sizes[1]), jnp.float32)
    params["b1"] = 0.1 * jax.random.normal(keys[1], (1, sizes[1]), jnp.float32)
    params["w2"] = 0.2 * jax.random.normal(keys[2], (sizes[1], sizes[2]), jnp.float32)
    params["b2"] = 0.1 * jax.random.normal(keys[3], (1, sizes[2]), jnp.float32)
    params["wmu"] = 0.2 * jax.random.normal(keys[4], (sizes[2], act_dim), jnp.float32)
    params["bmu"] = 0.1 * jax.random.normal(keys[5], (1, act_dim), jnp.float32)
    params["wls"] = 0.2 * jax.random.normal(keys[6], (sizes[2], act_dim), jnp.float32)
    params["bls"] = 0.1 * jax.random.normal(keys[7], (1, act_dim), jnp.float32)
    return params


def pack_params(params, obs_dim, hidden_sizes, act_dim):
    """One-time layout plumbing: zero-pad every feature dim to a multiple of 128
    and fuse the two head weights into a single (H_P, 2*A_P) matrix."""
    d_p = _round_up(obs_dim, 128)
    h1_p = _round_up(hidden_sizes[0], 128)
    h2_p = _round_up(hidden_sizes[1], 128)
    a_p = _round_up(act_dim, 128)

    def pad(w, rows, cols):
        out = jnp.zeros((rows, cols), jnp.float32)
        return out.at[:w.shape[0], :w.shape[1]].set(w)

    w_head = jnp.zeros((h2_p, 2 * a_p), jnp.float32)
    w_head = w_head.at[:hidden_sizes[1], :act_dim].set(params["wmu"])
    w_head = w_head.at[:hidden_sizes[1], a_p:a_p + act_dim].set(params["wls"])
    b_head = jnp.zeros((1, 2 * a_p), jnp.float32)
    b_head = b_head.at[:, :act_dim].set(params["bmu"])
    b_head = b_head.at[:, a_p:a_p + act_dim].set(params["bls"])

    return {
        "w1": pad(params["w1"], d_p, h1_p),
        "b1": pad(params["b1"], 1, h1_p),
        "w2": pad(params["w2"], h1_p, h2_p),
        "b2": pad(params["b2"], 1, h2_p),
        "w_head": w_head,
        "b_head": b_head,
        "dims": (d_p, h1_p, h2_p, a_p),
    }


def squashed_gaussian_actor(obs, packed, eps, act_limit, obs_dim, act_dim,
                            deterministic=False, with_logprob=True,
                            batch_tile=None):
    """Pallas forward. Returns (pi_action (B, act_dim), logp_pi (B,) or None)."""
    B = obs.shape[0]
    d_p, h1_p, h2_p, a_p = packed["dims"]

    if deterministic:
        eps = jnp.zeros_like(eps)

    # Batch grid: weights stay VMEM-resident (constant index_maps), activation
    # tiles are streamed / double-buffered.
    # TODO(synk): cast matmul operands to bf16 on v6e/v7x for large batches
    # (keep the elementwise log-prob tail in f32).
    if batch_tile is None:
        batch_tile = 512 if B >= 512 else _round_up(B, 8)
    grid_b = pl.cdiv(B, batch_tile)
    b_p = grid_b * batch_tile

    obs_p = jnp.zeros((b_p, d_p), jnp.float32).at[:B, :obs_dim].set(obs)
    eps_p = jnp.zeros((b_p, a_p), jnp.float32).at[:B, :act_dim].set(eps)

    kernel = functools.partial(_actor_kernel, act_limit=float(act_limit),
                               act_dim=act_dim, a_pad=a_p)

    act, logp = pl.pallas_call(
        kernel,
        out_shape=(
            jax.ShapeDtypeStruct((b_p, a_p), jnp.float32),
            jax.ShapeDtypeStruct((b_p, 128), jnp.float32),
        ),
        grid_spec=pltpu.PrefetchScalarGridSpec(
            num_scalar_prefetch=0,
            grid=(grid_b,),
            in_specs=[
                pl.BlockSpec((batch_tile, d_p), lambda i: (i, 0)),     # obs tile
                pl.BlockSpec((d_p, h1_p), lambda i: (0, 0)),           # w1 (resident)
                pl.BlockSpec((1, h1_p), lambda i: (0, 0)),             # b1
                pl.BlockSpec((h1_p, h2_p), lambda i: (0, 0)),          # w2
                pl.BlockSpec((1, h2_p), lambda i: (0, 0)),             # b2
                pl.BlockSpec((h2_p, 2 * a_p), lambda i: (0, 0)),       # fused head W
                pl.BlockSpec((1, 2 * a_p), lambda i: (0, 0)),          # fused head b
                pl.BlockSpec((batch_tile, a_p), lambda i: (i, 0)),     # eps tile
            ],
            out_specs=(
                pl.BlockSpec((batch_tile, a_p), lambda i: (i, 0)),     # act (lane-dense)
                pl.BlockSpec((batch_tile, 128), lambda i: (i, 0)),     # logp slab
            ),
        ),
        compiler_params=pltpu.CompilerParams(
            dimension_semantics=("parallel",),   # shard batch across TCs on v7x
            vmem_limit_bytes=64 << 20,
        ),
    )(obs_p, packed["w1"], packed["b1"], packed["w2"], packed["b2"],
      packed["w_head"], packed["b_head"], eps_p)

    act_out = act[:B, :act_dim]
    logp_out = logp[:B, 0] if with_logprob else None
    return act_out, logp_out


def reference_forward(obs, params, eps, act_limit):
    """Pure-JAX reference mirroring the PyTorch module semantics."""
    h = jnp.maximum(obs @ params["w1"] + params["b1"], 0.0)
    h = jnp.maximum(h @ params["w2"] + params["b2"], 0.0)
    mu = h @ params["wmu"] + params["bmu"]
    log_std = jnp.clip(h @ params["wls"] + params["bls"], LOG_STD_MIN, LOG_STD_MAX)
    std = jnp.exp(log_std)
    pi = mu + std * eps
    logp = jnp.sum(-0.5 * ((pi - mu) / std) ** 2 - log_std - 0.5 * jnp.log(2 * jnp.pi),
                   axis=-1)
    logp = logp - jnp.sum(2.0 * (jnp.log(2.0) - pi - jax.nn.softplus(-2.0 * pi)),
                          axis=-1)
    return act_limit * jnp.tanh(pi), logp


if __name__ == "__main__":
    B, obs_dim, act_dim = 8, 16, 8
    hidden_sizes = (32, 32)
    act_limit = 2.0

    key = jax.random.PRNGKey(0)
    k_obs, k_eps, k_params = jax.random.split(key, 3)

    obs = jax.random.normal(k_obs, (B, obs_dim), jnp.float32)
    eps = jax.random.normal(k_eps, (B, act_dim), jnp.float32)
    params = init_params(k_params, obs_dim, hidden_sizes, act_dim)
    packed = pack_params(params, obs_dim, hidden_sizes, act_dim)

    # Stochastic branch.
    act, logp = squashed_gaussian_actor(obs, packed, eps, act_limit,
                                        obs_dim, act_dim, deterministic=False)
    act = jax.block_until_ready(act)
    logp = jax.block_until_ready(logp)

    act_ref, logp_ref = reference_forward(obs, params, eps, act_limit)
    np.testing.assert_allclose(np.asarray(act), np.asarray(act_ref), rtol=1e-5, atol=1e-5)
    np.testing.assert_allclose(np.asarray(logp), np.asarray(logp_ref), rtol=1e-5, atol=1e-5)

    # Deterministic branch (pi_action = mu; logp is Normal.log_prob(mu) + squash corr).
    act_d, logp_d = squashed_gaussian_actor(obs, packed, eps, act_limit,
                                            obs_dim, act_dim, deterministic=True)
    jax.block_until_ready(act_d)
    act_d_ref, logp_d_ref = reference_forward(obs, params, jnp.zeros_like(eps), act_limit)
    np.testing.assert_allclose(np.asarray(act_d), np.asarray(act_d_ref), rtol=1e-5, atol=1e-5)
    np.testing.assert_allclose(np.asarray(logp_d), np.asarray(logp_d_ref), rtol=1e-5, atol=1e-5)

    # with_logprob=False path (logp is None, matching the module).
    act_nl, logp_nl = squashed_gaussian_actor(obs, packed, eps, act_limit,
                                              obs_dim, act_dim, with_logprob=False)
    jax.block_until_ready(act_nl)
    assert logp_nl is None
    np.testing.assert_allclose(np.asarray(act_nl), np.asarray(act_ref), rtol=1e-5, atol=1e-5)

    print("KERNEL_OK")
</pallas_src>

<mosaic_0001>
module attributes {stable_mosaic.version = 11 : i64} {
  func.func @_actor_kernel(%arg0: i32, %arg1: memref<8x128xf32, #tpu.memory_space<vmem>>, %arg2: memref<128x128xf32, #tpu.memory_space<vmem>>, %arg3: memref<1x128xf32, #tpu.memory_space<vmem>>, %arg4: memref<128x128xf32, #tpu.memory_space<vmem>>, %arg5: memref<1x128xf32, #tpu.memory_space<vmem>>, %arg6: memref<128x256xf32, #tpu.memory_space<vmem>>, %arg7: memref<1x256xf32, #tpu.memory_space<vmem>>, %arg8: memref<8x128xf32, #tpu.memory_space<vmem>>, %arg9: memref<8x128xf32, #tpu.memory_space<vmem>>, %arg10: memref<8x128xf32, #tpu.memory_space<vmem>>) attributes {dimension_semantics = [#tpu.dimension_semantics<parallel>], iteration_bounds = array<i64: 1>, scalar_prefetch = 0 : i64, scratch_operands = 0 : i64, tpu.core_type = #tpu.core_type<tc>, window_params = [{transform_indices = @transform_0, window_bounds = array<i64: 8, 128>}, {pipeline_mode = #tpu.pipeline_mode<synchronous>, transform_indices = @transform_1, window_bounds = array<i64: 128, 128>}, {pipeline_mode = #tpu.pipeline_mode<synchronous>, transform_indices = @transform_2, window_bounds = array<i64: 1, 128>}, {pipeline_mode = #tpu.pipeline_mode<synchronous>, transform_indices = @transform_3, window_bounds = array<i64: 128, 128>}, {pipeline_mode = #tpu.pipeline_mode<synchronous>, transform_indices = @transform_4, window_bounds = array<i64: 1, 128>}, {pipeline_mode = #tpu.pipeline_mode<synchronous>, transform_indices = @transform_5, window_bounds = array<i64: 128, 256>}, {pipeline_mode = #tpu.pipeline_mode<synchronous>, transform_indices = @transform_6, window_bounds = array<i64: 1, 256>}, {transform_indices = @transform_7, window_bounds = array<i64: 8, 128>}, {transform_indices = @transform_8, window_bounds = array<i64: 8, 128>}, {transform_indices = @transform_9, window_bounds = array<i64: 8, 128>}]} {
    %c0 = arith.constant 0 : index
    %c0_0 = arith.constant 0 : index
    %0 = vector.load %arg1[%c0, %c0_0] : memref<8x128xf32, #tpu.memory_space<vmem>>, vector<8x128xf32>
    %c0_1 = arith.constant 0 : index
    %c0_2 = arith.constant 0 : index
    %1 = vector.load %arg2[%c0_1, %c0_2] : memref<128x128xf32, #tpu.memory_space<vmem>>, vector<128x128xf32>
    %cst = arith.constant dense<0.000000e+00> : vector<8x128xf32>
    %2 = tpu.matmul %0, %1, %cst {dimension_numbers = #tpu.dot_dimension_numbers<[1], [0], [0], [1], [0, 0, 1, 1], [], []>} : vector<8x128xf32>, vector<128x128xf32>, vector<8x128xf32> -> vector<8x128xf32>
    %c0_3 = arith.constant 0 : index
    %c0_4 = arith.constant 0 : index
    %3 = vector.load %arg3[%c0_3, %c0_4] : memref<1x128xf32, #tpu.memory_space<vmem>>, vector<1x128xf32>
    %4 = vector.broadcast %3 : vector<1x128xf32> to vector<8x128xf32>
    %5 = arith.addf %2, %4 : vector<8x128xf32>
    %cst_5 = arith.constant 0.000000e+00 : f32
    %6 = vector.broadcast %cst_5 : f32 to vector<8x128xf32>
    %7 = arith.maximumf %5, %6 : vector<8x128xf32>
    %c0_6 = arith.constant 0 : index
    %c0_7 = arith.constant 0 : index
    %8 = vector.load %arg4[%c0_6, %c0_7] : memref<128x128xf32, #tpu.memory_space<vmem>>, vector<128x128xf32>
    %cst_8 = arith.constant dense<0.000000e+00> : vector<8x128xf32>
    %9 = tpu.matmul %7, %8, %cst_8 {dimension_numbers = #tpu.dot_dimension_numbers<[1], [0], [0], [1], [0, 0, 1, 1], [], []>} : vector<8x128xf32>, vector<128x128xf32>, vector<8x128xf32> -> vector<8x128xf32>
    %c0_9 = arith.constant 0 : index
    %c0_10 = arith.constant 0 : index
    %10 = vector.load %arg5[%c0_9, %c0_10] : memref<1x128xf32, #tpu.memory_space<vmem>>, vector<1x128xf32>
    %11 = vector.broadcast %10 : vector<1x128xf32> to vector<8x128xf32>
    %12 = arith.addf %9, %11 : vector<8x128xf32>
    %cst_11 = arith.constant 0.000000e+00 : f32
    %13 = vector.broadcast %cst_11 : f32 to vector<8x128xf32>
    %14 = arith.maximumf %12, %13 : vector<8x128xf32>
    %c0_12 = arith.constant 0 : index
    %c0_13 = arith.constant 0 : index
    %15 = vector.load %arg6[%c0_12, %c0_13] : memref<128x256xf32, #tpu.memory_space<vmem>>, vector<128x256xf32>
    %cst_14 = arith.constant dense<0.000000e+00> : vector<8x256xf32>
    %16 = tpu.matmul %14, %15, %cst_14 {dimension_numbers = #tpu.dot_dimension_numbers<[1], [0], [0], [1], [0, 0, 1, 1], [], []>} : vector<8x128xf32>, vector<128x256xf32>, vector<8x256xf32> -> vector<8x256xf32>
    %c0_15 = arith.constant 0 : index
    %c0_16 = arith.constant 0 : index
    %17 = vector.load %arg7[%c0_15, %c0_16] : memref<1x256xf32, #tpu.memory_space<vmem>>, vector<1x256xf32>
    %18 = vector.broadcast %17 : vector<1x256xf32> to vector<8x256xf32>
    %19 = arith.addf %16, %18 : vector<8x256xf32>
    %20 = vector.extract_strided_slice %19 {offsets = [0, 0], sizes = [8, 128], strides = [1, 1]} : vector<8x256xf32> to vector<8x128xf32>
    %21 = vector.extract_strided_slice %19 {offsets = [0, 128], sizes = [8, 128], strides = [1, 1]} : vector<8x256xf32> to vector<8x128xf32>
    %cst_17 = arith.constant -2.000000e+01 : f32
    %cst_18 = arith.constant 2.000000e+00 : f32
    %22 = vector.broadcast %cst_17 : f32 to vector<8x128xf32>
    %23 = arith.maximumf %22, %21 : vector<8x128xf32>
    %24 = vector.broadcast %cst_18 : f32 to vector<8x128xf32>
    %25 = arith.minimumf %24, %23 : vector<8x128xf32>
    %26 = math.exp %25 : vector<8x128xf32>
    %c0_19 = arith.constant 0 : index
    %c0_20 = arith.constant 0 : index
    %27 = vector.load %arg8[%c0_19, %c0_20] : memref<8x128xf32, #tpu.memory_space<vmem>>, vector<8x128xf32>
    %28 = arith.mulf %26, %27 : vector<8x128xf32>
    %29 = arith.addf %20, %28 : vector<8x128xf32>
    %30 = arith.mulf %27, %27 : vector<8x128xf32>
    %cst_21 = arith.constant -5.000000e-01 : f32
    %31 = vector.broadcast %cst_21 : f32 to vector<8x128xf32>
    %32 = arith.mulf %31, %30 : vector<8x128xf32>
    %33 = arith.subf %32, %25 : vector<8x128xf32>
    %cst_22 = arith.constant -2.000000e+00 : f32
    %34 = vector.broadcast %cst_22 : f32 to vector<8x128xf32>
    %35 = arith.mulf %34, %29 : vector<8x128xf32>
    %cst_23 = arith.constant 0.000000e+00 : f32
    %36 = vector.broadcast %cst_23 : f32 to vector<8x128xf32>
    %37 = arith.maximumf %36, %35 : vector<8x128xf32>
    %38 = vector.broadcast %cst_23 : f32 to vector<8x128xf32>
    %39 = arith.subf %38, %35 : vector<8x128xf32>
    %40 = arith.cmpf one, %39, %39 : vector<8x128xf32>
    %41 = vector.broadcast %cst_23 : f32 to vector<8x128xf32>
    %42 = arith.addf %41, %35 : vector<8x128xf32>
    %43 = math.absf %39 : vector<8x128xf32>
    %cst_24 = arith.constant 0.000000e+00 : f32
    %44 = vector.broadcast %cst_24 : f32 to vector<8x128xf32>
    %45 = arith.subf %44, %43 : vector<8x128xf32>
    %46 = math.exp %45 : vector<8x128xf32>
    %47 = math.log1p %46 : vector<8x128xf32>
    %48 = arith.addf %37, %47 : vector<8x128xf32>
    %49 = arith.select %40, %42, %48 : vector<8x128xi1>, vector<8x128xf32>
    %50 = arith.addf %29, %49 : vector<8x128xf32>
    %cst_25 = arith.constant 2.000000e+00 : f32
    %51 = vector.broadcast %cst_25 : f32 to vector<8x128xf32>
    %52 = arith.mulf %51, %50 : vector<8x128xf32>
    %53 = arith.addf %33, %52 : vector<8x128xf32>
    %cst_26 = arith.constant -2.305233 : f32
    %54 = vector.broadcast %cst_26 : f32 to vector<8x128xf32>
    %55 = arith.addf %53, %54 : vector<8x128xf32>
    %56 = tpu.iota {dimensions = array<i32: 1>} : vector<8x128xi32>
    %c8_i32 = arith.constant 8 : i32
    %57 = vector.broadcast %c8_i32 : i32 to vector<8x128xi32>
    %58 = arith.cmpi slt, %56, %57 : vector<8x128xi32>
    %cst_27 = arith.constant 0.000000e+00 : f32
    %59 = vector.broadcast %cst_27 : f32 to vector<8x128xf32>
    %60 = arith.select %58, %55, %59 : vector<8x128xi1>, vector<8x128xf32>
    %cst_28 = arith.constant dense<0.000000e+00> : vector<8xf32>
    %61 = vector.multi_reduction <add>, %60, %cst_28 [1] : vector<8x128xf32> to vector<8xf32>
    %62 = vector.shape_cast %61 : vector<8xf32> to vector<8x1xf32>
    %63 = math.tanh %29 : vector<8x128xf32>
    %cst_29 = arith.constant 2.000000e+00 : f32
    %64 = vector.broadcast %cst_29 : f32 to vector<8x128xf32>
    %65 = arith.mulf %64, %63 : vector<8x128xf32>
    %c0_30 = arith.constant 0 : index
    %c0_31 = arith.constant 0 : index
    %66 = vector.load %arg9[%c0_30, %c0_31] : memref<8x128xf32, #tpu.memory_space<vmem>>, vector<8x128xf32>
    tpu.vector_store %arg9[%c0_30, %c0_31], %65 {strides = array<i32>} : memref<8x128xf32, #tpu.memory_space<vmem>>, vector<8x128xf32>,
    %67 = vector.shape_cast %62 : vector<8x1xf32> to vector<8x1xf32>
    %68 = vector.broadcast %67 : vector<8x1xf32> to vector<8x128xf32>
    %c0_32 = arith.constant 0 : index
    %c0_33 = arith.constant 0 : index
    %69 = vector.load %arg10[%c0_32, %c0_33] : memref<8x128xf32, #tpu.memory_space<vmem>>, vector<8x128xf32>
    tpu.vector_store %arg10[%c0_32, %c0_33], %68 {strides = array<i32>} : memref<8x128xf32, #tpu.memory_space<vmem>>, vector<8x128xf32>,
    return
  }
  func.func @transform_0(%arg0: i32) -> (i32, i32) {
    %c0_i32 = arith.constant 0 : i32
    %c0_i32_0 = arith.constant 0 : i32
    return %arg0, %c0_i32 : i32, i32
  }
  func.func @transform_1(%arg0: i32) -> (i32, i32) {
    %c0_i32 = arith.constant 0 : i32
    %c0_i32_0 = arith.constant 0 : i32
    %c0_i32_1 = arith.constant 0 : i32
    return %c0_i32, %c0_i32_0 : i32, i32
  }
  func.func @transform_2(%arg0: i32) -> (i32, i32) {
    %c0_i32 = arith.constant 0 : i32
    %c0_i32_0 = arith.constant 0 : i32
    %c0_i32_1 = arith.constant 0 : i32
    return %c0_i32, %c0_i32_0 : i32, i32
  }
  func.func @transform_3(%arg0: i32) -> (i32, i32) {
    %c0_i32 = arith.constant 0 : i32
    %c0_i32_0 = arith.constant 0 : i32
    %c0_i32_1 = arith.constant 0 : i32
    return %c0_i32, %c0_i32_0 : i32, i32
  }
  func.func @transform_4(%arg0: i32) -> (i32, i32) {
    %c0_i32 = arith.constant 0 : i32
    %c0_i32_0 = arith.constant 0 : i32
    %c0_i32_1 = arith.constant 0 : i32
    return %c0_i32, %c0_i32_0 : i32, i32
  }
  func.func @transform_5(%arg0: i32) -> (i32, i32) {
    %c0_i32 = arith.constant 0 : i32
    %c0_i32_0 = arith.constant 0 : i32
    %c0_i32_1 = arith.constant 0 : i32
    return %c0_i32, %c0_i32_0 : i32, i32
  }
  func.func @transform_6(%arg0: i32) -> (i32, i32) {
    %c0_i32 = arith.constant 0 : i32
    %c0_i32_0 = arith.constant 0 : i32
    %c0_i32_1 = arith.constant 0 : i32
    return %c0_i32, %c0_i32_0 : i32, i32
  }
  func.func @transform_7(%arg0: i32) -> (i32, i32) {
    %c0_i32 = arith.constant 0 : i32
    %c0_i32_0 = arith.constant 0 : i32
    return %arg0, %c0_i32 : i32, i32
  }
  func.func @transform_8(%arg0: i32) -> (i32, i32) {
    %c0_i32 = arith.constant 0 : i32
    %c0_i32_0 = arith.constant 0 : i32
    return %arg0, %c0_i32 : i32, i32
  }
  func.func @transform_9(%arg0: i32) -> (i32, i32) {
    %c0_i32 = arith.constant 0 : i32
    %c0_i32_0 = arith.constant 0 : i32
    return %arg0, %c0_i32 : i32, i32
  }
}

</mosaic_0001>

<llo_original>
// kernel: tpu_custom_call.1
$region0: #{tpu_custom_call.1}
  #allocation0 [shape = 'u32[]', space=smem, size = 0x4, offset = 0x4, fixed_abs, tag = 'smem constant byte address 0x4 - core index']
  #allocation1 [shape = 'u32[144,128]{1,0:T(1,128)}', space=vmem, size = 0x12000, scoped, tag = 'internal scratch']
  %s0 = inlined_call_operand.hbm [shape: f32[8,128], index: 0, kind: input, shape index: {}]
  %s1 = inlined_call_operand.hbm [shape: f32[128,128], index: 1, kind: input, shape index: {}]
  %s2 = inlined_call_operand.hbm [shape: f32[1,128], index: 2, kind: input, shape index: {}]
  %s3 = inlined_call_operand.hbm [shape: f32[128,128], index: 3, kind: input, shape index: {}]
  %s4 = inlined_call_operand.hbm [shape: f32[1,128], index: 4, kind: input, shape index: {}]
  %s5 = inlined_call_operand.hbm [shape: f32[128,256], index: 5, kind: input, shape index: {}]
  %s6 = inlined_call_operand.hbm [shape: f32[1,256], index: 6, kind: input, shape index: {}]
  %s7 = inlined_call_operand.hbm [shape: f32[8,128], index: 7, kind: input, shape index: {}]
  %s8 = inlined_call_operand.hbm [shape: f32[8,128], index: 8, kind: output, shape index: {0}]
  %s9 = inlined_call_operand.hbm [shape: f32[8,128], index: 9, kind: output, shape index: {1}]
  %10 = xla_tuple %s8, %s9
  %s11 = sld [smem:[#allocation0]]
  $region82: #{tpu_custom_call.1} parent=0
    _
  %s13 = ssub.s32 1, %s11
  %s14 = scalar_select 0, %s13, %s11
  $region1: #{tpu_custom_call.1} parent=0
    #allocation2 [shape = 'u8[4096]{0}', space=vmem, size = 0x1000, scoped, tag = 'input window, operand 0, single buffered']
    #allocation3 [shape = 's32[1]{0}', space=sflag, size = 0x4, scoped, tag = 'scoped memory for tpu_custom_call.1']
    #allocation4 [shape = 's32[1]{0}', space=sflag, size = 0x4, scoped, tag = 'scoped memory for tpu_custom_call.1']
    #allocation5 [shape = 'u8[65536]{0}', space=vmem, size = 0x10000, scoped, tag = 'input window, operand 1, single buffered']
    #allocation6 [shape = 's32[1]{0}', space=sflag, size = 0x4, scoped, tag = 'scoped memory for tpu_custom_call.1']
    #allocation7 [shape = 'u8[512]{0}', space=vmem, size = 0x400, scoped, tag = 'input window, operand 2, single buffered']
    #allocation8 [shape = 'u8[65536]{0}', space=vmem, size = 0x10000, scoped, tag = 'input window, operand 3, single buffered']
    #allocation9 [shape = 's32[1]{0}', space=sflag, size = 0x4, scoped, tag = 'scoped memory for tpu_custom_call.1']
    #allocation10 [shape = 'u8[512]{0}', space=vmem, size = 0x400, scoped, tag = 'input window, operand 4, single buffered']
    #allocation11 [shape = 'u8[131072]{0}', space=vmem, size = 0x20000, scoped, tag = 'input window, operand 5, single buffered']
    #allocation12 [shape = 's32[1]{0}', space=sflag, size = 0x4, scoped, tag = 'scoped memory for tpu_custom_call.1']
    #allocation13 [shape = 'u8[1024]{0}', space=vmem, size = 0x400, scoped, tag = 'input window, operand 6, single buffered']
    #allocation14 [shape = 'u8[4096]{0}', space=vmem, size = 0x1000, scoped, tag = 'input window, operand 7, single buffered']
    #allocation15 [shape = 's32[1]{0}', space=sflag, size = 0x4, scoped, tag = 'scoped memory for tpu_custom_call.1']
    #allocation16 [shape = 'u8[4096]{0}', space=vmem, size = 0x1000, scoped, tag = 'output window, operand 0, single buffered']
    #allocation17 [shape = 'u8[4096]{0}', space=vmem, size = 0x1000, scoped, tag = 'output window, operand 1, single buffered']
    #allocation18 [shape = 's32[1]{0}', space=sflag, size = 0x4, scoped, tag = 'scoped memory for tpu_custom_call.1']
    %15 = vsyncpa [#allocation3], 0
    %16 = vsyncpa [#allocation6], 0
    %17 = vsyncpa [#allocation9], 0
    %18 = vsyncpa [#allocation12], 0
    %19 = vsyncpa [#allocation15], 0
    %20 = vsyncpa [#allocation4], 0
    %21 = vsyncpa [#allocation18], 0
    // Predicated region
    $region2: #{tpu_custom_call.1} parent=1 // pred_check
      _
    $region3: #{tpu_custom_call.1} parent=1 // pred_check_branch
      %23 = sbr.rel (0) target = $region5
    $region4: #{tpu_custom_call.1} parent=1 // pred_region
      %s25 = ssub.s32 128, 128
      %26 = vsyncadd [#allocation3], %s25
      %s28 = sshll.u32 [#allocation2], 4
      %s29 = int_to_ptr.vmem [resolvable:$true] %s28
      %31 = dma.hbm_to_vmem [thread:$0]  %s0, 128, %s29, [#allocation3]
    $region5: #{tpu_custom_call.1} parent=1 // pred_fallthru
      _
    // Predicated region
    $region6: #{tpu_custom_call.1} parent=1 // pred_check
      _
    $region7: #{tpu_custom_call.1} parent=1 // pred_check_branch
      %33 = sbr.rel (0) target = $region9
    $region8: #{tpu_custom_call.1} parent=1 // pred_region
      %s35 = ssub.s32 2048, 2048
      %36 = vsyncadd [#allocation6], %s35
      %s37 = sshll.u32 [#allocation5], 4
      %s38 = int_to_ptr.vmem [resolvable:$true] %s37
      %43 = dma.hbm_to_vmem [thread:$0]  %s1, 2048, %s38, [#allocation6], 128, 128, 8
    $region9: #{tpu_custom_call.1} parent=1 // pred_fallthru
      _
    // Predicated region
    $region10: #{tpu_custom_call.1} parent=1 // pred_check
      _
    $region11: #{tpu_custom_call.1} parent=1 // pred_check_branch
      %45 = sbr.rel (0) target = $region13
    $region12: #{tpu_custom_call.1} parent=1 // pred_region
      %s47 = ssub.s32 16, 16
      %48 = vsyncadd [#allocation6], %s47
      %s50 = sshll.u32 [#allocation7], 4
      %s51 = int_to_ptr.vmem [resolvable:$true] %s50
      %53 = dma.hbm_to_vmem [thread:$0]  %s2, 16, %s51, [#allocation6]
    $region13: #{tpu_custom_call.1} parent=1 // pred_fallthru
      _
    // Predicated region
    $region14: #{tpu_custom_call.1} parent=1 // pred_check
      _
    $region15: #{tpu_custom_call.1} parent=1 // pred_check_branch
      %55 = sbr.rel (0) target = $region17
    $region16: #{tpu_custom_call.1} parent=1 // pred_region
      %s57 = ssub.s32 2048, 2048
      %58 = vsyncadd [#allocation9], %s57
      %s59 = sshll.u32 [#allocation8], 4
      %s60 = int_to_ptr.vmem [resolvable:$true] %s59
      %65 = dma.hbm_to_vmem [thread:$0]  %s3, 2048, %s60, [#allocation9], 128, 128, 8
    $region17: #{tpu_custom_call.1} parent=1 // pred_fallthru
      _
    // Predicated region
    $region18: #{tpu_custom_call.1} parent=1 // pred_check
      _
    $region19: #{tpu_custom_call.1} parent=1 // pred_check_branch
      %67 = sbr.rel (0) target = $region21
    $region20: #{tpu_custom_call.1} parent=1 // pred_region
      %s69 = ssub.s32 16, 16
      %70 = vsyncadd [#allocation9], %s69
      %s72 = sshll.u32 [#allocation10], 4
      %s73 = int_to_ptr.vmem [resolvable:$true] %s72
      %75 = dma.hbm_to_vmem [thread:$0]  %s4, 16, %s73, [#allocation9]
    $region21: #{tpu_custom_call.1} parent=1 // pred_fallthru
      _
    // Predicated region
    $region22: #{tpu_custom_call.1} parent=1 // pred_check
      _
    $region23: #{tpu_custom_call.1} parent=1 // pred_check_branch
      %77 = sbr.rel (0) target = $region25
    $region24: #{tpu_custom_call.1} parent=1 // pred_region
      %s79 = ssub.s32 4096, 4096
      %80 = vsyncadd [#allocation12], %s79
      %s81 = sshll.u32 [#allocation11], 4
      %s82 = int_to_ptr.vmem [resolvable:$true] %s81
      %87 = dma.hbm_to_vmem [thread:$0]  %s5, 4096, %s82, [#allocation12], 256, 256, 16
    $region25: #{tpu_custom_call.1} parent=1 // pred_fallthru
      _
    // Predicated region
    $region26: #{tpu_custom_call.1} parent=1 // pred_check
      _
    $region27: #{tpu_custom_call.1} parent=1 // pred_check_branch
      %89 = sbr.rel (0) target = $region29
    $region28: #{tpu_custom_call.1} parent=1 // pred_region
      %s91 = ssub.s32 32, 32
      %92 = vsyncadd [#allocation12], %s91
      %s94 = sshll.u32 [#allocation13], 4
      %s95 = int_to_ptr.vmem [resolvable:$true] %s94
      %97 = dma.hbm_to_vmem [thread:$0]  %s6, 32, %s95, [#allocation12]
    $region29: #{tpu_custom_call.1} parent=1 // pred_fallthru
      _
    // Predicated region
    $region30: #{tpu_custom_call.1} parent=1 // pred_check
      _
    $region31: #{tpu_custom_call.1} parent=1 // pred_check_branch
      %99 = sbr.rel (0) target = $region33
    $region32: #{tpu_custom_call.1} parent=1 // pred_region
      %s101 = ssub.s32 128, 128
      %102 = vsyncadd [#allocation15], %s101
      %s104 = sshll.u32 [#allocation14], 4
      %s105 = int_to_ptr.vmem [resolvable:$true] %s104
      %107 = dma.hbm_to_vmem [thread:$0]  %s7, 128, %s105, [#allocation15]
    $region33: #{tpu_custom_call.1} parent=1 // pred_fallthru
      _
    // Predicated region
    $region34: #{tpu_custom_call.1} parent=1 // pred_check
      _
    $region35: #{tpu_custom_call.1} parent=1 // pred_check_branch
      %109 = sbr.rel (0) target = $region37
    $region36: #{tpu_custom_call.1} parent=1 // pred_region
      %110 = dma.done [#allocation3], 128
    $region37: #{tpu_custom_call.1} parent=1 // pred_fallthru
      _
    // Predicated region
    $region38: #{tpu_custom_call.1} parent=1 // pred_check
      _
    $region39: #{tpu_custom_call.1} parent=1 // pred_check_branch
      %112 = sbr.rel (0) target = $region41
    $region40: #{tpu_custom_call.1} parent=1 // pred_region
      %113 = dma.done [#allocation6], 2048
    $region41: #{tpu_custom_call.1} parent=1 // pred_fallthru
      _
    // Predicated region
    $region42: #{tpu_custom_call.1} parent=1 // pred_check
      _
    $region43: #{tpu_custom_call.1} parent=1 // pred_check_branch
      %115 = sbr.rel (0) target = $region45
    $region44: #{tpu_custom_call.1} parent=1 // pred_region
      %116 = dma.done [#allocation6], 16
    $region45: #{tpu_custom_call.1} parent=1 // pred_fallthru
      _
    // Predicated region
    $region46: #{tpu_custom_call.1} parent=1 // pred_check
      _
    $region47: #{tpu_custom_call.1} parent=1 // pred_check_branch
      %118 = sbr.rel (0) target = $region49
    $region48: #{tpu_custom_call.1} parent=1 // pred_region
      %119 = dma.done [#allocation9], 2048
    $region49: #{tpu_custom_call.1} parent=1 // pred_fallthru
      _
    // Predicated region
    $region50: #{tpu_custom_call.1} parent=1 // pred_check
      _
    $region51: #{tpu_custom_call.1} parent=1 // pred_check_branch
      %121 = sbr.rel (0) target = $region53
    $region52: #{tpu_custom_call.1} parent=1 // pred_region
      %122 = dma.done [#allocation9], 16
    $region53: #{tpu_custom_call.1} parent=1 // pred_fallthru
      _
    // Predicated region
    $region54: #{tpu_custom_call.1} parent=1 // pred_check
      _
    $region55: #{tpu_custom_call.1} parent=1 // pred_check_branch
      %124 = sbr.rel (0) target = $region57
    $region56: #{tpu_custom_call.1} parent=1 // pred_region
      %125 = dma.done [#allocation12], 4096
    $region57: #{tpu_custom_call.1} parent=1 // pred_fallthru
      _
    // Predicated region
    $region58: #{tpu_custom_call.1} parent=1 // pred_check
      _
    $region59: #{tpu_custom_call.1} parent=1 // pred_check_branch
      %127 = sbr.rel (0) target = $region61
    $region60: #{tpu_custom_call.1} parent=1 // pred_region
      %128 = dma.done [#allocation12], 32
    $region61: #{tpu_custom_call.1} parent=1 // pred_fallthru
      _
    // Predicated region
    $region62: #{tpu_custom_call.1} parent=1 // pred_check
      _
    $region63: #{tpu_custom_call.1} parent=1 // pred_check_branch
      %130 = sbr.rel (0) target = $region65
    $region64: #{tpu_custom_call.1} parent=1 // pred_region
      %131 = dma.done [#allocation15], 128
    $region65: #{tpu_custom_call.1} parent=1 // pred_fallthru
      _
    %v132 = vld [vmem:[#allocation2] sm:$0xff]
    %v133 = vld [vmem:[#allocation5] sm:$0xff]
    %v134 = vld [vmem:[#allocation5 + $0x8] sm:$0xff]
    %v135 = vld [vmem:[#allocation5 + $0x10] sm:$0xff]
    %v136 = vld [vmem:[#allocation5 + $0x18] sm:$0xff]
    %v137 = vld [vmem:[#allocation5 + $0x20] sm:$0xff]
    %v138 = vld [vmem:[#allocation5 + $0x28] sm:$0xff]
    %v139 = vld [vmem:[#allocation5 + $0x30] sm:$0xff]
    %v140 = vld [vmem:[#allocation5 + $0x38] sm:$0xff]
    %v141 = vld [vmem:[#allocation5 + $0x40] sm:$0xff]
    %v142 = vld [vmem:[#allocation5 + $0x48] sm:$0xff]
    %v143 = vld [vmem:[#allocation5 + $0x50] sm:$0xff]
    %v144 = vld [vmem:[#allocation5 + $0x58] sm:$0xff]
    %v145 = vld [vmem:[#allocation5 + $0x60] sm:$0xff]
    %v146 = vld [vmem:[#allocation5 + $0x68] sm:$0xff]
    %v147 = vld [vmem:[#allocation5 + $0x70] sm:$0xff]
    %v148 = vld [vmem:[#allocation5 + $0x78] sm:$0xff]
    %v149 = vld [vmem:[#allocation7] sm:$0x1]
    %v151 = vlaneseq
    %v152 = vshrl.u32 %v151, 7
    %v153 = vsub.s32 0, %v152
    %v154 = vrot.slane %v149, %v153
    %156 = vmatprep.subr.mxu0 0.0
    %157 = vmatpush1.msra.mxu0 %v133
    %158 = vmatprep.subr.mxu0 0.0
    %159 = vmatpush1.msra.mxu0 %v134
    %160 = vmatprep.subr.mxu0 0.0
    %161 = vmatpush1.msra.mxu0 %v135
    %162 = vmatprep.subr.mxu0 0.0
    %163 = vmatpush1.msra.mxu0 %v136
    %164 = vmatprep.subr.mxu0 0.0
    %165 = vmatpush1.msra.mxu0 %v137
    %166 = vmatprep.subr.mxu0 0.0
    %167 = vmatpush1.msra.mxu0 %v138
    %168 = vmatprep.subr.mxu0 0.0
    %169 = vmatpush1.msra.mxu0 %v139
    %170 = vmatprep.subr.mxu0 0.0
    %171 = vmatpush1.msra.mxu0 %v140
    %172 = vmatprep.subr.mxu0 0.0
    %173 = vmatpush1.msra.mxu0 %v141
    %174 = vmatprep.subr.mxu0 0.0
    %175 = vmatpush1.msra.mxu0 %v142
    %176 = vmatprep.subr.mxu0 0.0
    %177 = vmatpush1.msra.mxu0 %v143
    %178 = vmatprep.subr.mxu0 0.0
    %179 = vmatpush1.msra.mxu0 %v144
    %180 = vmatprep.subr.mxu0 0.0
    %181 = vmatpush1.msra.mxu0 %v145
    %182 = vmatprep.subr.mxu0 0.0
    %183 = vmatpush1.msra.mxu0 %v146
    %184 = vmatprep.subr.mxu0 0.0
    %185 = vmatpush1.msra.mxu0 %v147
    %186 = vmatprep.subr.mxu0 0.0
    %187 = vmatpush1.msra.mxu0 %v148
    %188 = vmatprep.subr.mxu0 0.0
    %189 = vmatpush1.msra.mxu0 0.0
    %190 = vmatprep.subr.mxu0 0.0
    %191 = vmatpush1.msra.mxu0 0.0
    %192 = vmatprep.subr.mxu0 0.0
    %193 = vmatpush1.msra.mxu0 0.0
    %194 = vmatprep.subr.mxu0 0.0
    %195 = vmatpush1.msra.mxu0 0.0
    %196 = vmatprep.subr.mxu0 0.0
    %197 = vmatpush1.msra.mxu0 0.0
    %198 = vmatprep.subr.mxu0 0.0
    %199 = vmatpush1.msra.mxu0 0.0
    %200 = vmatprep.subr.mxu0 0.0
    %201 = vmatpush1.msra.mxu0 0.0
    %202 = vmatprep.subr.mxu0 0.0
    %203 = vmatpush1.msra.mxu0 0.0
    %204 = vmatprep.subr.mxu0 0.0
    %205 = vmatpush1.msra.mxu0 0.0
    %206 = vmatprep.subr.mxu0 0.0
    %207 = vmatpush1.msra.mxu0 0.0
    %208 = vmatprep.subr.mxu0 0.0
    %209 = vmatpush1.msra.mxu0 0.0
    %210 = vmatprep.subr.mxu0 0.0
    %211 = vmatpush1.msra.mxu0 0.0
    %212 = vmatprep.subr.mxu0 0.0
    %213 = vmatpush1.msra.mxu0 0.0
    %214 = vmatprep.subr.mxu0 0.0
    %215 = vmatpush1.msra.mxu0 0.0
    %216 = vmatprep.subr.mxu0 0.0
    %217 = vmatpush1.msra.mxu0 0.0
    %218 = vmatprep.subr.mxu0 0.0
    %219 = vmatpush1.msra.mxu0 0.0
    %220 = vmatprep.mubr.f32.mxu0 0.0
    %221 = vmatmul.mubr.f32.gmra.mrb[0].mxu0 %v132
    %v222 = vpop.f32.mrb[0].mxu0
    %v223 = vadd.f32 %v154, %v222
    %v224 = vpop.f32.mrb[0].mxu0
    %225 = vdwg.mxu0
    %v226 = vmax.f32 %v223, 0.0
    %v227 = vld [vmem:[#allocation8] sm:$0xff]
    %v228 = vld [vmem:[#allocation8 + $0x8] sm:$0xff]
    %v229 = vld [vmem:[#allocation8 + $0x10] sm:$0xff]
    %v230 = vld [vmem:[#allocation8 + $0x18] sm:$0xff]
    %v231 = vld [vmem:[#allocation8 + $0x20] sm:$0xff]
    %v232 = vld [vmem:[#allocation8 + $0x28] sm:$0xff]
    %v233 = vld [vmem:[#allocation8 + $0x30] sm:$0xff]
    %v234 = vld [vmem:[#allocation8 + $0x38] sm:$0xff]
    %v235 = vld [vmem:[#allocation8 + $0x40] sm:$0xff]
    %v236 = vld [vmem:[#allocation8 + $0x48] sm:$0xff]
    %v237 = vld [vmem:[#allocation8 + $0x50] sm:$0xff]
    %v238 = vld [vmem:[#allocation8 + $0x58] sm:$0xff]
    %v239 = vld [vmem:[#allocation8 + $0x60] sm:$0xff]
    %v240 = vld [vmem:[#allocation8 + $0x68] sm:$0xff]
    %v241 = vld [vmem:[#allocation8 + $0x70] sm:$0xff]
    %v242 = vld [vmem:[#allocation8 + $0x78] sm:$0xff]
    %v243 = vld [vmem:[#allocation10] sm:$0x1]
    %v245 = vlaneseq
    %v246 = vshrl.u32 %v245, 7
    %v247 = vsub.s32 0, %v246
    %v248 = vrot.slane %v243, %v247
    %250 = vmatprep.subr.mxu0 0.0
    %251 = vmatpush1.msra.mxu0 %v227
    %252 = vmatprep.subr.mxu0 0.0
    %253 = vmatpush1.msra.mxu0 %v228
    %254 = vmatprep.subr.mxu0 0.0
    %255 = vmatpush1.msra.mxu0 %v229
    %256 = vmatprep.subr.mxu0 0.0
    %257 = vmatpush1.msra.mxu0 %v230
    %258 = vmatprep.subr.mxu0 0.0
    %259 = vmatpush1.msra.mxu0 %v231
    %260 = vmatprep.subr.mxu0 0.0
    %261 = vmatpush1.msra.mxu0 %v232
    %262 = vmatprep.subr.mxu0 0.0
    %263 = vmatpush1.msra.mxu0 %v233
    %264 = vmatprep.subr.mxu0 0.0
    %265 = vmatpush1.msra.mxu0 %v234
    %266 = vmatprep.subr.mxu0 0.0
    %267 = vmatpush1.msra.mxu0 %v235
    %268 = vmatprep.subr.mxu0 0.0
    %269 = vmatpush1.msra.mxu0 %v236
    %270 = vmatprep.subr.mxu0 0.0
    %271 = vmatpush1.msra.mxu0 %v237
    %272 = vmatprep.subr.mxu0 0.0
    %273 = vmatpush1.msra.mxu0 %v238
    %274 = vmatprep.subr.mxu0 0.0
    %275 = vmatpush1.msra.mxu0 %v239
    %276 = vmatprep.subr.mxu0 0.0
    %277 = vmatpush1.msra.mxu0 %v240
    %278 = vmatprep.subr.mxu0 0.0
    %279 = vmatpush1.msra.mxu0 %v241
    %280 = vmatprep.subr.mxu0 0.0
    %281 = vmatpush1.msra.mxu0 %v242
    %282 = vmatprep.subr.mxu0 0.0
    %283 = vmatpush1.msra.mxu0 0.0
    %284 = vmatprep.subr.mxu0 0.0
    %285 = vmatpush1.msra.mxu0 0.0
    %286 = vmatprep.subr.mxu0 0.0
    %287 = vmatpush1.msra.mxu0 0.0
    %288 = vmatprep.subr.mxu0 0.0
    %289 = vmatpush1.msra.mxu0 0.0
    %290 = vmatprep.subr.mxu0 0.0
    %291 = vmatpush1.msra.mxu0 0.0
    %292 = vmatprep.subr.mxu0 0.0
    %293 = vmatpush1.msra.mxu0 0.0
    %294 = vmatprep.subr.mxu0 0.0
    %295 = vmatpush1.msra.mxu0 0.0
    %296 = vmatprep.subr.mxu0 0.0
    %297 = vmatpush1.msra.mxu0 0.0
    %298 = vmatprep.subr.mxu0 0.0
    %299 = vmatpush1.msra.mxu0 0.0
    %300 = vmatprep.subr.mxu0 0.0
    %301 = vmatpush1.msra.mxu0 0.0
    %302 = vmatprep.subr.mxu0 0.0
    %303 = vmatpush1.msra.mxu0 0.0
    %304 = vmatprep.subr.mxu0 0.0
    %305 = vmatpush1.msra.mxu0 0.0
    %306 = vmatprep.subr.mxu0 0.0
    %307 = vmatpush1.msra.mxu0 0.0
    %308 = vmatprep.subr.mxu0 0.0
    %309 = vmatpush1.msra.mxu0 0.0
    %310 = vmatprep.subr.mxu0 0.0
    %311 = vmatpush1.msra.mxu0 0.0
    %312 = vmatprep.subr.mxu0 0.0
    %313 = vmatpush1.msra.mxu0 0.0
    %314 = vmatprep.mubr.f32.mxu0 0.0
    %315 = vmatmul.mubr.f32.gmra.mrb[0].mxu0 %v226
    %v316 = vpop.f32.mrb[0].mxu0
    %v317 = vadd.f32 %v248, %v316
    %v318 = vpop.f32.mrb[0].mxu0
    %319 = vdwg.mxu0
    %v320 = vmax.f32 %v317, 0.0
    %v321 = vld [vmem:[#allocation11] sm:$0xff]
    %v322 = vld [vmem:[#allocation11 + $0x8] sm:$0xff]
    %v323 = vld [vmem:[#allocation11 + $0x10] sm:$0xff]
    %v324 = vld [vmem:[#allocation11 + $0x18] sm:$0xff]
    %v325 = vld [vmem:[#allocation11 + $0x20] sm:$0xff]
    %v326 = vld [vmem:[#allocation11 + $0x28] sm:$0xff]
    %v327 = vld [vmem:[#allocation11 + $0x30] sm:$0xff]
    %v328 = vld [vmem:[#allocation11 + $0x38] sm:$0xff]
    %v329 = vld [vmem:[#allocation11 + $0x40] sm:$0xff]
    %v330 = vld [vmem:[#allocation11 + $0x48] sm:$0xff]
    %v331 = vld [vmem:[#allocation11 + $0x50] sm:$0xff]
    %v332 = vld [vmem:[#allocation11 + $0x58] sm:$0xff]
    %v333 = vld [vmem:[#allocation11 + $0x60] sm:$0xff]
    %v334 = vld [vmem:[#allocation11 + $0x68] sm:$0xff]
    %v335 = vld [vmem:[#allocation11 + $0x70] sm:$0xff]
    %v336 = vld [vmem:[#allocation11 + $0x78] sm:$0xff]
    %v337 = vld [vmem:[#allocation11 + $0x80] sm:$0xff]
    %v338 = vld [vmem:[#allocation11 + $0x88] sm:$0xff]
    %v339 = vld [vmem:[#allocation11 + $0x90] sm:$0xff]
    %v340 = vld [vmem:[#allocation11 + $0x98] sm:$0xff]
    %v341 = vld [vmem:[#allocation11 + $0xa0] sm:$0xff]
    %v342 = vld [vmem:[#allocation11 + $0xa8] sm:$0xff]
    %v343 = vld [vmem:[#allocation11 + $0xb0] sm:$0xff]
    %v344 = vld [vmem:[#allocation11 + $0xb8] sm:$0xff]
    %v345 = vld [vmem:[#allocation11 + $0xc0] sm:$0xff]
    %v346 = vld [vmem:[#allocation11 + $0xc8] sm:$0xff]
    %v347 = vld [vmem:[#allocation11 + $0xd0] sm:$0xff]
    %v348 = vld [vmem:[#allocation11 + $0xd8] sm:$0xff]
    %v349 = vld [vmem:[#allocation11 + $0xe0] sm:$0xff]
    %v350 = vld [vmem:[#allocation11 + $0xe8] sm:$0xff]
    %v351 = vld [vmem:[#allocation11 + $0xf0] sm:$0xff]
    %v352 = vld [vmem:[#allocation11 + $0xf8] sm:$0xff]
    %v353 = vld [vmem:[#allocation13] sm:$0x3]
    %v355 = vlaneseq
    %v356 = vshrl.u32 %v355, 7
    %v357 = vsub.s32 0, %v356
    %v358 = vrot.slane %v353, %v357
    %v359 = vlaneseq
    %v360 = vshrl.u32 %v359, 7
    %v361 = vsub.s32 1, %v360
    %v362 = vrot.slane %v353, %v361
    %365 = vmatprep.subr.mxu0 %v322
    %366 = vmatpush1.msra.mxu0 %v321
    %367 = vmatprep.subr.mxu0 %v324
    %368 = vmatpush1.msra.mxu0 %v323
    %369 = vmatprep.subr.mxu0 %v326
    %370 = vmatpush1.msra.mxu0 %v325
    %371 = vmatprep.subr.mxu0 %v328
    %372 = vmatpush1.msra.mxu0 %v327
    %373 = vmatprep.subr.mxu0 %v330
    %374 = vmatpush1.msra.mxu0 %v329
    %375 = vmatprep.subr.mxu0 %v332
    %376 = vmatpush1.msra.mxu0 %v331
    %377 = vmatprep.subr.mxu0 %v334
    %378 = vmatpush1.msra.mxu0 %v333
    %379 = vmatprep.subr.mxu0 %v336
    %380 = vmatpush1.msra.mxu0 %v335
    %381 = vmatprep.subr.mxu0 %v338
    %382 = vmatpush1.msra.mxu0 %v337
    %383 = vmatprep.subr.mxu0 %v340
    %384 = vmatpush1.msra.mxu0 %v339
    %385 = vmatprep.subr.mxu0 %v342
    %386 = vmatpush1.msra.mxu0 %v341
    %387 = vmatprep.subr.mxu0 %v344
    %388 = vmatpush1.msra.mxu0 %v343
    %389 = vmatprep.subr.mxu0 %v346
    %390 = vmatpush1.msra.mxu0 %v345
    %391 = vmatprep.subr.mxu0 %v348
    %392 = vmatpush1.msra.mxu0 %v347
    %393 = vmatprep.subr.mxu0 %v350
    %394 = vmatpush1.msra.mxu0 %v349
    %395 = vmatprep.subr.mxu0 %v352
    %396 = vmatpush1.msra.mxu0 %v351
    %397 = vmatprep.subr.mxu0 0.0
    %398 = vmatpush1.msra.mxu0 0.0
    %399 = vmatprep.subr.mxu0 0.0
    %400 = vmatpush1.msra.mxu0 0.0
    %401 = vmatprep.subr.mxu0 0.0
    %402 = vmatpush1.msra.mxu0 0.0
    %403 = vmatprep.subr.mxu0 0.0
    %404 = vmatpush1.msra.mxu0 0.0
    %405 = vmatprep.subr.mxu0 0.0
    %406 = vmatpush1.msra.mxu0 0.0
    %407 = vmatprep.subr.mxu0 0.0
    %408 = vmatpush1.msra.mxu0 0.0
    %409 = vmatprep.subr.mxu0 0.0
    %410 = vmatpush1.msra.mxu0 0.0
    %411 = vmatprep.subr.mxu0 0.0
    %412 = vmatpush1.msra.mxu0 0.0
    %413 = vmatprep.subr.mxu0 0.0
    %414 = vmatpush1.msra.mxu0 0.0
    %415 = vmatprep.subr.mxu0 0.0
    %416 = vmatpush1.msra.mxu0 0.0
    %417 = vmatprep.subr.mxu0 0.0
    %418 = vmatpush1.msra.mxu0 0.0
    %419 = vmatprep.subr.mxu0 0.0
    %420 = vmatpush1.msra.mxu0 0.0
    %421 = vmatprep.subr.mxu0 0.0
    %422 = vmatpush1.msra.mxu0 0.0
    %423 = vmatprep.subr.mxu0 0.0
    %424 = vmatpush1.msra.mxu0 0.0
    %425 = vmatprep.subr.mxu0 0.0
    %426 = vmatpush1.msra.mxu0 0.0
    %427 = vmatprep.subr.mxu0 0.0
    %428 = vmatpush1.msra.mxu0 0.0
    %429 = vmatprep.mubr.f32.mxu0 0.0
    %430 = vmatmul.mubr.f32.gmra.mrb[0].mxu0 %v320
    %v431 = vpop.f32.mrb[0].mxu0
    %v432 = vadd.f32 %v358, %v431
    %v433 = vpop.f32.mrb[0].mxu0
    %v434 = vadd.f32 %v362, %v433
    %435 = vdwg.mxu0
    %v436 = vmax.f32 %v434, -20.0
    %v437 = vmin.f32 %v436, 2.0
    %v438 = vmul.f32 %v437, 1.442695
    %v439 = vpow.pop %v438
    %v440 = vld [vmem:[#allocation14] sm:$0xff]
    %v441 = vmul.f32 %v439, %v440
    %v442 = vadd.f32 %v432, %v441
    %v443 = vmul.f32 %v440, %v440
    %v444 = vmul.f32 %v443, -0.5
    %v445 = vsub.f32 %v444, %v437
    %v446 = vmul.f32 %v442, -2.0
    %v447 = vmax.f32 %v446, 0.0
    %v448 = vsub.f32 0.0, %v446
    %vm449 = vcmp.ne.f32.partialorder %v448, %v448
    %v450 = vadd.f32 %v446, 0.0
    %v451 = vand.u32 2147483647, %v448
    %v452 = vsub.f32 0.0, %v451
    %v453 = vmul.f32 %v452, 1.442695
    %v454 = vpow.pop %v453
    %v455 = vadd.f32 %v454, 1.0
    %v456 = vlog2.pop %v455
    %v457 = vmul.f32 %v456, 0.6931472
    %v458 = vmul.f32 -0.5, %v454
    %v459 = vadd.f32 %v458, 1.0
    %v460 = vmul.f32 %v459, %v454
    %v461 = vand.u32 2147483647, %v454
    %vm462 = vcmp.lt.f32.partialorder %v461, 0.0004427343
    %v463 = vsel %vm462, %v460, %v457
    %v464 = vadd.f32 %v447, %v463
    %v465 = vsel %vm449, %v450, %v464
    %v466 = vadd.f32 %v442, %v465
    %v467 = vmul.f32 %v466, 2.0
    %v468 = vadd.f32 %v445, %v467
    %v469 = vadd.f32 %v468, -2.305233
    %v470 = vlaneseq
    %v471 = vand.u32 %v470, 127
    %vm472 = vcmp.lt.s32.totalorder %v471, 8
    %v473 = vsel %vm472, %v469, 0.0
    %474 = vadd.xlane.f32.xlu0 %v473
    %v475 = vpop.xlane.xlu0 %474
    %v476 = vtanh.pop %v442
    %v477 = vmul.f32 %v476, 2.0
    %478 = vst [vmem:[#allocation16] sm:$0xff] %v477
    %479 = vst [vmem:[#allocation17] sm:$0xff] %v475
    // Predicated region
    $region66: #{tpu_custom_call.1} parent=1 // pred_check
      _
    $region67: #{tpu_custom_call.1} parent=1 // pred_check_branch
      %481 = sbr.rel (0) target = $region69
    $region68: #{tpu_custom_call.1} parent=1 // pred_region
      %s483 = ssub.s32 128, 128
      %484 = vsyncadd [#allocation4], %s483
      %s486 = sshll.u32 [#allocation16], 4
      %s487 = int_to_ptr.vmem [resolvable:$true] %s486
      %489 = dma.vmem_to_hbm [thread:$0]  %s487, 128, %s8, [#allocation4]
    $region69: #{tpu_custom_call.1} parent=1 // pred_fallthru
      _
    // Predicated region
    $region70: #{tpu_custom_call.1} parent=1 // pred_check
      _
    $region71: #{tpu_custom_call.1} parent=1 // pred_check_branch
      %491 = sbr.rel (0) target = $region73
    $region72: #{tpu_custom_call.1} parent=1 // pred_region
      %s493 = ssub.s32 128, 128
      %494 = vsyncadd [#allocation18], %s493
      %s496 = sshll.u32 [#allocation17], 4
      %s497 = int_to_ptr.vmem [resolvable:$true] %s496
      %499 = dma.vmem_to_hbm [thread:$0]  %s497, 128, %s9, [#allocation18]
    $region73: #{tpu_custom_call.1} parent=1 // pred_fallthru
      _
    // Predicated region
    $region74: #{tpu_custom_call.1} parent=1 // pred_check
      _
    $region75: #{tpu_custom_call.1} parent=1 // pred_check_branch
      %501 = sbr.rel (0) target = $region77
    $region76: #{tpu_custom_call.1} parent=1 // pred_region
      %502 = dma.done [#allocation4], 128
    $region77: #{tpu_custom_call.1} parent=1 // pred_fallthru
      _
    // Predicated region
    $region78: #{tpu_custom_call.1} parent=1 // pred_check
      _
    $region79: #{tpu_custom_call.1} parent=1 // pred_check_branch
      %504 = sbr.rel (0) target = $region81
    $region80: #{tpu_custom_call.1} parent=1 // pred_region
      %505 = dma.done [#allocation18], 128
    $region81: #{tpu_custom_call.1} parent=1 // pred_fallthru
      _
    %506 = vsyncpa [#allocation3], 1
    %507 = vsyncpa [#allocation6], 1
    %508 = vsyncpa [#allocation9], 1
    %509 = vsyncpa [#allocation12], 1
    %510 = vsyncpa [#allocation15], 1
    %511 = vsyncpa [#allocation4], 1
    %512 = vsyncpa [#allocation18], 1

</llo_original>
